<compile_context>
chip_gen: v7x
topology: tpu7x:2x2x1
jax: 0.10.0
libtpu: 0.0.40
codegen_flags: <defaults>
</compile_context>

<pallas_src>
import jax
import jax.numpy as jnp
from jax.experimental import pallas as pl
from jax.experimental.pallas import tpu as pltpu


def mlp_kernel(x_ref, w2_ref, b2_ref, w3_ref, b3_ref,
               w6_ref, b6_ref, w7_ref, b7_ref, out_ref):
    # fc2: 256 -> 128, relu   (bf16 operands, f32 accumulate)
    x = x_ref[...].astype(jnp.bfloat16)
    h = jnp.dot(x, w2_ref[...], preferred_element_type=jnp.float32)
    h = jnp.maximum(h + b2_ref[...], 0.0)
    # fc3: 128 -> 64 (zero-padded to 128), relu
    h = jnp.dot(h.astype(jnp.bfloat16), w3_ref[...],
                preferred_element_type=jnp.float32)
    h = jnp.maximum(h + b3_ref[...], 0.0)
    # fc6: 64 (padded 128) -> 128, relu
    h = jnp.dot(h.astype(jnp.bfloat16), w6_ref[...],
                preferred_element_type=jnp.float32)
    h = jnp.maximum(h + b6_ref[...], 0.0)
    # fc7: 128 -> 256, tanh (f32 elementwise on VPU/EUP)
    h = jnp.dot(h.astype(jnp.bfloat16), w7_ref[...],
                preferred_element_type=jnp.float32)
    out_ref[...] = jnp.tanh(h + b7_ref[...])


def net3_forward(x, params, *, tm=512):
    """x: (N, C, H, W=256) float32, NCHW like the PyTorch module."""
    n, c, h, w = x.shape
    assert w == 256, "fc2 expects 256 input features"
    rows = n * c

    # Free (bitcast) reshape: row r corresponds to (n, c); columns [0:256]
    # of the flattened (H*W) axis are exactly the H=0 features.
    x_flat = x.reshape(rows, h * w)

    (w2, b2), (w3, b3), (w6, b6), (w7, b7) = params

    # Zero-pad the 64-wide middle layer to 128 lanes (exactly preserves math).
    w3p = jnp.pad(w3, ((0, 0), (0, 64)))      # (128, 64)  -> (128, 128)
    b3p = jnp.pad(b3, ((0, 0), (0, 64)))      # (1, 64)    -> (1, 128)
    w6p = jnp.pad(w6, ((0, 64), (0, 0)))      # (64, 128)  -> (128, 128)

    # Pre-cast weights to bf16 (halves VMEM footprint, 2-4x MXU throughput).
    bf = jnp.bfloat16
    w2b, w3b, w6b, w7b = (a.astype(bf) for a in (w2, w3p, w6p, w7))

    # Row tiling: big tiles amortize per-step overhead, small batches get a
    # single full-extent block.  Partial last tiles are masked by Pallas.
    tm = tm if rows >= tm else rows
    grid = (pl.cdiv(rows, tm),)

    row_spec = pl.BlockSpec((tm, 256), lambda i: (i, 0))
    pinned = lambda shape: pl.BlockSpec(shape, lambda i: (0, 0))  # VMEM-resident

    out = pl.pallas_call(
        mlp_kernel,
        out_shape=jax.ShapeDtypeStruct((rows, 256), jnp.float32),
        grid=grid,
        in_specs=[
            row_spec,                              # x: lane-block 0 == H=0 slice
            pinned(w2b.shape), pinned(b2.shape),
            pinned(w3b.shape), pinned(b3p.shape),
            pinned(w6b.shape), pinned(b6.shape),
            pinned(w7b.shape), pinned(b7.shape),
        ],
        out_specs=row_spec,
        compiler_params=pltpu.CompilerParams(
            dimension_semantics=("parallel",)),
    )(x_flat, w2b, b2, w3b, b3p, w6b, b6, w7b, b7)

    y = out.reshape(n, c, 256)
    return (y, y)  # forward returns (x, x)


def init_params(key):
    """Deterministic PyTorch-Linear-style init. Weights stored as (in, out)."""
    def linear(key, fan_in, fan_out):
        k_w, k_b = jax.random.split(key)
        bound = 1.0 / jnp.sqrt(float(fan_in))
        w = jax.random.uniform(k_w, (fan_in, fan_out), jnp.float32, -bound, bound)
        b = jax.random.uniform(k_b, (1, fan_out), jnp.float32, -bound, bound)
        return w, b

    k2, k3, k6, k7 = jax.random.split(key, 4)
    fc2 = linear(k2, 256, 128)
    fc3 = linear(k3, 128, 64)
    fc6 = linear(k6, 64, 128)
    fc7 = linear(k7, 128, 256)
    return fc2, fc3, fc6, fc7


if __name__ == "__main__":
    key = jax.random.PRNGKey(0)
    k_x, k_p = jax.random.split(key)

    # Small NCHW input; W must be 256 because fc2 is Linear(256, 128).
    x = jax.random.normal(k_x, (2, 4, 4, 256), dtype=jnp.float32)
    params = init_params(k_p)

    y1, y2 = jax.jit(net3_forward)(x, params)
    jax.block_until_ready((y1, y2))

    # References in plain JAX.
    (w2, b2), (w3, b3), (w6, b6), (w7, b7) = params
    xr = x[:, :, 0, :].reshape(-1, 256)

    def reference(use_bf16):
        def mm(a, w):
            if use_bf16:
                a = a.astype(jnp.bfloat16)
                w = w.astype(jnp.bfloat16)
            return jnp.dot(a, w, preferred_element_type=jnp.float32)
        r = jnp.maximum(mm(xr, w2) + b2, 0.0)
        r = jnp.maximum(mm(r, w3) + b3, 0.0)
        r = jnp.maximum(mm(r, w6) + b6, 0.0)
        r = jnp.tanh(mm(r, w7) + b7)
        return r.reshape(2, 4, 256)

    # Tight check against a bf16-matmul / f32-accumulate reference (same math).
    assert jnp.allclose(y1, reference(True), atol=2e-3, rtol=2e-3), \
        "mismatch vs bf16 JAX reference"
    # Loose check against the pure-f32 reference (bf16 operand rounding only).
    assert jnp.allclose(y1, reference(False), atol=5e-2), \
        "mismatch vs f32 JAX reference"
    assert jnp.allclose(y1, y2)

    print("KERNEL_OK")
</pallas_src>

<mosaic_0001>
module attributes {stable_mosaic.version = 11 : i64} {
  func.func @mlp_kernel(%arg0: i32, %arg1: memref<8x256xf32, #tpu.memory_space<vmem>>, %arg2: memref<256x128xbf16, #tpu.memory_space<vmem>>, %arg3: memref<1x128xf32, #tpu.memory_space<vmem>>, %arg4: memref<128x128xbf16, #tpu.memory_space<vmem>>, %arg5: memref<1x128xf32, #tpu.memory_space<vmem>>, %arg6: memref<128x128xbf16, #tpu.memory_space<vmem>>, %arg7: memref<1x128xf32, #tpu.memory_space<vmem>>, %arg8: memref<128x256xbf16, #tpu.memory_space<vmem>>, %arg9: memref<1x256xf32, #tpu.memory_space<vmem>>, %arg10: memref<8x256xf32, #tpu.memory_space<vmem>>) attributes {dimension_semantics = [#tpu.dimension_semantics<parallel>], iteration_bounds = array<i64: 1>, scalar_prefetch = 0 : i64, scratch_operands = 0 : i64, tpu.core_type = #tpu.core_type<tc>, window_params = [{transform_indices = @transform_0, window_bounds = array<i64: 8, 256>}, {pipeline_mode = #tpu.pipeline_mode<synchronous>, transform_indices = @transform_1, window_bounds = array<i64: 256, 128>}, {pipeline_mode = #tpu.pipeline_mode<synchronous>, transform_indices = @transform_2, window_bounds = array<i64: 1, 128>}, {pipeline_mode = #tpu.pipeline_mode<synchronous>, transform_indices = @transform_3, window_bounds = array<i64: 128, 128>}, {pipeline_mode = #tpu.pipeline_mode<synchronous>, transform_indices = @transform_4, window_bounds = array<i64: 1, 128>}, {pipeline_mode = #tpu.pipeline_mode<synchronous>, transform_indices = @transform_5, window_bounds = array<i64: 128, 128>}, {pipeline_mode = #tpu.pipeline_mode<synchronous>, transform_indices = @transform_6, window_bounds = array<i64: 1, 128>}, {pipeline_mode = #tpu.pipeline_mode<synchronous>, transform_indices = @transform_7, window_bounds = array<i64: 128, 256>}, {pipeline_mode = #tpu.pipeline_mode<synchronous>, transform_indices = @transform_8, window_bounds = array<i64: 1, 256>}, {transform_indices = @transform_9, window_bounds = array<i64: 8, 256>}]} {
    %c0 = arith.constant 0 : index
    %c0_0 = arith.constant 0 : index
    %0 = vector.load %arg1[%c0, %c0_0] : memref<8x256xf32, #tpu.memory_space<vmem>>, vector<8x256xf32>
    %1 = arith.truncf %0 : vector<8x256xf32> to vector<8x256xbf16>
    %c0_1 = arith.constant 0 : index
    %c0_2 = arith.constant 0 : index
    %2 = vector.load %arg2[%c0_1, %c0_2] : memref<256x128xbf16, #tpu.memory_space<vmem>>, vector<256x128xbf16>
    %cst = arith.constant dense<0.000000e+00> : vector<8x128xf32>
    %3 = tpu.matmul %1, %2, %cst {dimension_numbers = #tpu.dot_dimension_numbers<[1], [0], [0], [1], [0, 0, 1, 1], [], []>} : vector<8x256xbf16>, vector<256x128xbf16>, vector<8x128xf32> -> vector<8x128xf32>
    %c0_3 = arith.constant 0 : index
    %c0_4 = arith.constant 0 : index
    %4 = vector.load %arg3[%c0_3, %c0_4] : memref<1x128xf32, #tpu.memory_space<vmem>>, vector<1x128xf32>
    %5 = vector.broadcast %4 : vector<1x128xf32> to vector<8x128xf32>
    %6 = arith.addf %3, %5 : vector<8x128xf32>
    %cst_5 = arith.constant 0.000000e+00 : f32
    %7 = vector.broadcast %cst_5 : f32 to vector<8x128xf32>
    %8 = arith.maximumf %6, %7 : vector<8x128xf32>
    %9 = arith.truncf %8 : vector<8x128xf32> to vector<8x128xbf16>
    %c0_6 = arith.constant 0 : index
    %c0_7 = arith.constant 0 : index
    %10 = vector.load %arg4[%c0_6, %c0_7] : memref<128x128xbf16, #tpu.memory_space<vmem>>, vector<128x128xbf16>
    %cst_8 = arith.constant dense<0.000000e+00> : vector<8x128xf32>
    %11 = tpu.matmul %9, %10, %cst_8 {dimension_numbers = #tpu.dot_dimension_numbers<[1], [0], [0], [1], [0, 0, 1, 1], [], []>} : vector<8x128xbf16>, vector<128x128xbf16>, vector<8x128xf32> -> vector<8x128xf32>
    %c0_9 = arith.constant 0 : index
    %c0_10 = arith.constant 0 : index
    %12 = vector.load %arg5[%c0_9, %c0_10] : memref<1x128xf32, #tpu.memory_space<vmem>>, vector<1x128xf32>
    %13 = vector.broadcast %12 : vector<1x128xf32> to vector<8x128xf32>
    %14 = arith.addf %11, %13 : vector<8x128xf32>
    %cst_11 = arith.constant 0.000000e+00 : f32
    %15 = vector.broadcast %cst_11 : f32 to vector<8x128xf32>
    %16 = arith.maximumf %14, %15 : vector<8x128xf32>
    %17 = arith.truncf %16 : vector<8x128xf32> to vector<8x128xbf16>
    %c0_12 = arith.constant 0 : index
    %c0_13 = arith.constant 0 : index
    %18 = vector.load %arg6[%c0_12, %c0_13] : memref<128x128xbf16, #tpu.memory_space<vmem>>, vector<128x128xbf16>
    %cst_14 = arith.constant dense<0.000000e+00> : vector<8x128xf32>
    %19 = tpu.matmul %17, %18, %cst_14 {dimension_numbers = #tpu.dot_dimension_numbers<[1], [0], [0], [1], [0, 0, 1, 1], [], []>} : vector<8x128xbf16>, vector<128x128xbf16>, vector<8x128xf32> -> vector<8x128xf32>
    %c0_15 = arith.constant 0 : index
    %c0_16 = arith.constant 0 : index
    %20 = vector.load %arg7[%c0_15, %c0_16] : memref<1x128xf32, #tpu.memory_space<vmem>>, vector<1x128xf32>
    %21 = vector.broadcast %20 : vector<1x128xf32> to vector<8x128xf32>
    %22 = arith.addf %19, %21 : vector<8x128xf32>
    %cst_17 = arith.constant 0.000000e+00 : f32
    %23 = vector.broadcast %cst_17 : f32 to vector<8x128xf32>
    %24 = arith.maximumf %22, %23 : vector<8x128xf32>
    %25 = arith.truncf %24 : vector<8x128xf32> to vector<8x128xbf16>
    %c0_18 = arith.constant 0 : index
    %c0_19 = arith.constant 0 : index
    %26 = vector.load %arg8[%c0_18, %c0_19] : memref<128x256xbf16, #tpu.memory_space<vmem>>, vector<128x256xbf16>
    %cst_20 = arith.constant dense<0.000000e+00> : vector<8x256xf32>
    %27 = tpu.matmul %25, %26, %cst_20 {dimension_numbers = #tpu.dot_dimension_numbers<[1], [0], [0], [1], [0, 0, 1, 1], [], []>} : vector<8x128xbf16>, vector<128x256xbf16>, vector<8x256xf32> -> vector<8x256xf32>
    %c0_21 = arith.constant 0 : index
    %c0_22 = arith.constant 0 : index
    %28 = vector.load %arg9[%c0_21, %c0_22] : memref<1x256xf32, #tpu.memory_space<vmem>>, vector<1x256xf32>
    %29 = vector.broadcast %28 : vector<1x256xf32> to vector<8x256xf32>
    %30 = arith.addf %27, %29 : vector<8x256xf32>
    %31 = math.tanh %30 : vector<8x256xf32>
    %c0_23 = arith.constant 0 : index
    %c0_24 = arith.constant 0 : index
    %32 = vector.load %arg10[%c0_23, %c0_24] : memref<8x256xf32, #tpu.memory_space<vmem>>, vector<8x256xf32>
    tpu.vector_store %arg10[%c0_23, %c0_24], %31 {strides = array<i32>} : memref<8x256xf32, #tpu.memory_space<vmem>>, vector<8x256xf32>,
    return
  }
  func.func @transform_0(%arg0: i32) -> (i32, i32) {
    %c0_i32 = arith.constant 0 : i32
    %c0_i32_0 = arith.constant 0 : i32
    return %arg0, %c0_i32 : i32, i32
  }
  func.func @transform_1(%arg0: i32) -> (i32, i32) {
    %c0_i32 = arith.constant 0 : i32
    %c0_i32_0 = arith.constant 0 : i32
    %c0_i32_1 = arith.constant 0 : i32
    return %c0_i32, %c0_i32_0 : i32, i32
  }
  func.func @transform_2(%arg0: i32) -> (i32, i32) {
    %c0_i32 = arith.constant 0 : i32
    %c0_i32_0 = arith.constant 0 : i32
    %c0_i32_1 = arith.constant 0 : i32
    return %c0_i32, %c0_i32_0 : i32, i32
  }
  func.func @transform_3(%arg0: i32) -> (i32, i32) {
    %c0_i32 = arith.constant 0 : i32
    %c0_i32_0 = arith.constant 0 : i32
    %c0_i32_1 = arith.constant 0 : i32
    return %c0_i32, %c0_i32_0 : i32, i32
  }
  func.func @transform_4(%arg0: i32) -> (i32, i32) {
    %c0_i32 = arith.constant 0 : i32
    %c0_i32_0 = arith.constant 0 : i32
    %c0_i32_1 = arith.constant 0 : i32
    return %c0_i32, %c0_i32_0 : i32, i32
  }
  func.func @transform_5(%arg0: i32) -> (i32, i32) {
    %c0_i32 = arith.constant 0 : i32
    %c0_i32_0 = arith.constant 0 : i32
    %c0_i32_1 = arith.constant 0 : i32
    return %c0_i32, %c0_i32_0 : i32, i32
  }
  func.func @transform_6(%arg0: i32) -> (i32, i32) {
    %c0_i32 = arith.constant 0 : i32
    %c0_i32_0 = arith.constant 0 : i32
    %c0_i32_1 = arith.constant 0 : i32
    return %c0_i32, %c0_i32_0 : i32, i32
  }
  func.func @transform_7(%arg0: i32) -> (i32, i32) {
    %c0_i32 = arith.constant 0 : i32
    %c0_i32_0 = arith.constant 0 : i32
    %c0_i32_1 = arith.constant 0 : i32
    return %c0_i32, %c0_i32_0 : i32, i32
  }
  func.func @transform_8(%arg0: i32) -> (i32, i32) {
    %c0_i32 = arith.constant 0 : i32
    %c0_i32_0 = arith.constant 0 : i32
    %c0_i32_1 = arith.constant 0 : i32
    return %c0_i32, %c0_i32_0 : i32, i32
  }
  func.func @transform_9(%arg0: i32) -> (i32, i32) {
    %c0_i32 = arith.constant 0 : i32
    %c0_i32_0 = arith.constant 0 : i32
    return %arg0, %c0_i32 : i32, i32
  }
}

</mosaic_0001>

<llo_original>
// kernel: net3_forward.1
$region0: #{net3_forward.1}
  #allocation0 [shape = 'u32[]', space=smem, size = 0x4, offset = 0x4, fixed_abs, tag = 'smem constant byte address 0x4 - core index']
  #allocation1 [shape = 'u32[144,128]{1,0:T(1,128)}', space=vmem, size = 0x12000, scoped, tag = 'internal scratch']
  %s0 = inlined_call_operand.vmem [shape: f32[8,1024], index: 0, kind: input, shape index: {}]
  %s1 = inlined_call_operand.vmem [shape: bf16[256,128], index: 1, kind: input, shape index: {}]
  %s2 = inlined_call_operand.vmem [shape: f32[1,128], index: 2, kind: input, shape index: {}]
  %s3 = inlined_call_operand.vmem [shape: bf16[128,128], index: 3, kind: input, shape index: {}]
  %s4 = inlined_call_operand.vmem [shape: f32[1,128], index: 4, kind: input, shape index: {}]
  %s5 = inlined_call_operand.vmem [shape: bf16[128,128], index: 5, kind: input, shape index: {}]
  %s6 = inlined_call_operand.vmem [shape: f32[1,128], index: 6, kind: input, shape index: {}]
  %s7 = inlined_call_operand.vmem [shape: bf16[128,256], index: 7, kind: input, shape index: {}]
  %s8 = inlined_call_operand.vmem [shape: f32[1,256], index: 8, kind: input, shape index: {}]
  %s9 = inlined_call_operand.vmem [shape: f32[8,256], index: 9, kind: output, shape index: {}]
  %s10 = sld [smem:[#allocation0]]
  $region46: #{net3_forward.1} parent=0
    _
  %s12 = ssub.s32 1, %s10
  %s13 = scalar_select 0, %s12, %s10
  // Predicated region
  $region2: #{net3_forward.1} parent=0 // pred_check
    _
  $region3: #{net3_forward.1} parent=0 // pred_check_branch
    %15 = sbr.rel (0) target = $region5
  $region4: #{net3_forward.1} parent=0 // pred_region
    _
  $region5: #{net3_forward.1} parent=0 // pred_fallthru
    _
  // Predicated region
  $region6: #{net3_forward.1} parent=0 // pred_check
    _
  $region7: #{net3_forward.1} parent=0 // pred_check_branch
    %17 = sbr.rel (0) target = $region9
  $region8: #{net3_forward.1} parent=0 // pred_region
    _
  $region9: #{net3_forward.1} parent=0 // pred_fallthru
    _
  // Predicated region
  $region10: #{net3_forward.1} parent=0 // pred_check
    _
  $region11: #{net3_forward.1} parent=0 // pred_check_branch
    %19 = sbr.rel (0) target = $region13
  $region12: #{net3_forward.1} parent=0 // pred_region
    _
  $region13: #{net3_forward.1} parent=0 // pred_fallthru
    _
  // Predicated region
  $region14: #{net3_forward.1} parent=0 // pred_check
    _
  $region15: #{net3_forward.1} parent=0 // pred_check_branch
    %21 = sbr.rel (0) target = $region17
  $region16: #{net3_forward.1} parent=0 // pred_region
    _
  $region17: #{net3_forward.1} parent=0 // pred_fallthru
    _
  // Predicated region
  $region18: #{net3_forward.1} parent=0 // pred_check
    _
  $region19: #{net3_forward.1} parent=0 // pred_check_branch
    %23 = sbr.rel (0) target = $region21
  $region20: #{net3_forward.1} parent=0 // pred_region
    _
  $region21: #{net3_forward.1} parent=0 // pred_fallthru
    _
  // Predicated region
  $region22: #{net3_forward.1} parent=0 // pred_check
    _
  $region23: #{net3_forward.1} parent=0 // pred_check_branch
    %25 = sbr.rel (0) target = $region25
  $region24: #{net3_forward.1} parent=0 // pred_region
    _
  $region25: #{net3_forward.1} parent=0 // pred_fallthru
    _
  // Predicated region
  $region26: #{net3_forward.1} parent=0 // pred_check
    _
  $region27: #{net3_forward.1} parent=0 // pred_check_branch
    %27 = sbr.rel (0) target = $region29
  $region28: #{net3_forward.1} parent=0 // pred_region
    _
  $region29: #{net3_forward.1} parent=0 // pred_fallthru
    _
  // Predicated region
  $region30: #{net3_forward.1} parent=0 // pred_check
    _
  $region31: #{net3_forward.1} parent=0 // pred_check_branch
    %29 = sbr.rel (0) target = $region33
  $region32: #{net3_forward.1} parent=0 // pred_region
    _
  $region33: #{net3_forward.1} parent=0 // pred_fallthru
    _
  // Predicated region
  $region34: #{net3_forward.1} parent=0 // pred_check
    _
  $region35: #{net3_forward.1} parent=0 // pred_check_branch
    %31 = sbr.rel (0) target = $region37
  $region36: #{net3_forward.1} parent=0 // pred_region
    _
  $region37: #{net3_forward.1} parent=0 // pred_fallthru
    _
  %v33 = vld [vmem:[%s0] sm:$0xff]
  %v34 = vld [vmem:[%s0 + $0x8] sm:$0xff]
  %v35 = vpack.c.bf16 %v33, %v33
  %v36 = vpack.c.bf16 %v34, %v34
  %v37 = vld [vmem:[%s1] sm:$0xf]
  %v38 = vld [vmem:[%s1 + $0x4] sm:$0xf]
  %v39 = vld [vmem:[%s1 + $0x8] sm:$0xf]
  %v40 = vld [vmem:[%s1 + $0xc] sm:$0xf]
  %v41 = vld [vmem:[%s1 + $0x10] sm:$0xf]
  %v42 = vld [vmem:[%s1 + $0x14] sm:$0xf]
  %v43 = vld [vmem:[%s1 + $0x18] sm:$0xf]
  %v44 = vld [vmem:[%s1 + $0x1c] sm:$0xf]
  %v45 = vld [vmem:[%s1 + $0x20] sm:$0xf]
  %v46 = vld [vmem:[%s1 + $0x24] sm:$0xf]
  %v47 = vld [vmem:[%s1 + $0x28] sm:$0xf]
  %v48 = vld [vmem:[%s1 + $0x2c] sm:$0xf]
  %v49 = vld [vmem:[%s1 + $0x30] sm:$0xf]
  %v50 = vld [vmem:[%s1 + $0x34] sm:$0xf]
  %v51 = vld [vmem:[%s1 + $0x38] sm:$0xf]
  %v52 = vld [vmem:[%s1 + $0x3c] sm:$0xf]
  %v53 = vld [vmem:[%s1 + $0x40] sm:$0xf]
  %v54 = vld [vmem:[%s1 + $0x44] sm:$0xf]
  %v55 = vld [vmem:[%s1 + $0x48] sm:$0xf]
  %v56 = vld [vmem:[%s1 + $0x4c] sm:$0xf]
  %v57 = vld [vmem:[%s1 + $0x50] sm:$0xf]
  %v58 = vld [vmem:[%s1 + $0x54] sm:$0xf]
  %v59 = vld [vmem:[%s1 + $0x58] sm:$0xf]
  %v60 = vld [vmem:[%s1 + $0x5c] sm:$0xf]
  %v61 = vld [vmem:[%s1 + $0x60] sm:$0xf]
  %v62 = vld [vmem:[%s1 + $0x64] sm:$0xf]
  %v63 = vld [vmem:[%s1 + $0x68] sm:$0xf]
  %v64 = vld [vmem:[%s1 + $0x6c] sm:$0xf]
  %v65 = vld [vmem:[%s1 + $0x70] sm:$0xf]
  %v66 = vld [vmem:[%s1 + $0x74] sm:$0xf]
  %v67 = vld [vmem:[%s1 + $0x78] sm:$0xf]
  %v68 = vld [vmem:[%s1 + $0x7c] sm:$0xf]
  %v69 = vld [vmem:[%s2] sm:$0x1]
  %v71 = vlaneseq
  %v72 = vshrl.u32 %v71, 7
  %v73 = vsub.s32 0, %v72
  %v74 = vrot.slane %v69, %v73
  %v108 = vunpack.c.l.b16 %v37
  %v109 = vunpack.c.l.b16 %v38
  %v110 = vunpack.c.l.b16 %v39
  %v111 = vunpack.c.l.b16 %v40
  %v112 = vunpack.c.l.b16 %v41
  %v113 = vunpack.c.l.b16 %v42
  %v114 = vunpack.c.l.b16 %v43
  %v115 = vunpack.c.l.b16 %v44
  %v116 = vunpack.c.l.b16 %v45
  %v117 = vunpack.c.l.b16 %v46
  %v118 = vunpack.c.l.b16 %v47
  %v119 = vunpack.c.l.b16 %v48
  %v120 = vunpack.c.l.b16 %v49
  %v121 = vunpack.c.l.b16 %v50
  %v122 = vunpack.c.l.b16 %v51
  %v123 = vunpack.c.l.b16 %v52
  %v124 = vunpack.c.l.b16 %v53
  %v125 = vunpack.c.l.b16 %v54
  %v126 = vunpack.c.l.b16 %v55
  %v127 = vunpack.c.l.b16 %v56
  %v128 = vunpack.c.l.b16 %v57
  %v129 = vunpack.c.l.b16 %v58
  %v130 = vunpack.c.l.b16 %v59
  %v131 = vunpack.c.l.b16 %v60
  %v132 = vunpack.c.l.b16 %v61
  %v133 = vunpack.c.l.b16 %v62
  %v134 = vunpack.c.l.b16 %v63
  %v135 = vunpack.c.l.b16 %v64
  %v136 = vunpack.c.l.b16 %v65
  %v137 = vunpack.c.l.b16 %v66
  %v138 = vunpack.c.l.b16 %v67
  %v139 = vunpack.c.l.b16 %v68
  %v140 = vpack.c.b16 %v109, %v108
  %v141 = vpack.c.b16 %v111, %v110
  %v142 = vpack.c.b16 %v113, %v112
  %v143 = vpack.c.b16 %v115, %v114
  %v144 = vpack.c.b16 %v117, %v116
  %v145 = vpack.c.b16 %v119, %v118
  %v146 = vpack.c.b16 %v121, %v120
  %v147 = vpack.c.b16 %v123, %v122
  %v148 = vpack.c.b16 %v125, %v124
  %v149 = vpack.c.b16 %v127, %v126
  %v150 = vpack.c.b16 %v129, %v128
  %v151 = vpack.c.b16 %v131, %v130
  %v152 = vpack.c.b16 %v133, %v132
  %v153 = vpack.c.b16 %v135, %v134
  %v154 = vpack.c.b16 %v137, %v136
  %v155 = vpack.c.b16 %v139, %v138
  %172 = vmatprep.subr.bf16.mxu0 0
  %173 = vmatpush1.bf16.msra.mxu0 %v140
  %174 = vmatprep.subr.bf16.mxu0 0
  %175 = vmatpush1.bf16.msra.mxu0 %v141
  %176 = vmatprep.subr.bf16.mxu0 0
  %177 = vmatpush1.bf16.msra.mxu0 %v142
  %178 = vmatprep.subr.bf16.mxu0 0
  %179 = vmatpush1.bf16.msra.mxu0 %v143
  %180 = vmatprep.subr.bf16.mxu0 0
  %181 = vmatpush1.bf16.msra.mxu0 %v144
  %182 = vmatprep.subr.bf16.mxu0 0
  %183 = vmatpush1.bf16.msra.mxu0 %v145
  %184 = vmatprep.subr.bf16.mxu0 0
  %185 = vmatpush1.bf16.msra.mxu0 %v146
  %186 = vmatprep.subr.bf16.mxu0 0
  %187 = vmatpush1.bf16.msra.mxu0 %v147
  %188 = vmatprep.subr.bf16.mxu0 0
  %189 = vmatpush1.bf16.msra.mxu0 %v148
  %190 = vmatprep.subr.bf16.mxu0 0
  %191 = vmatpush1.bf16.msra.mxu0 %v149
  %192 = vmatprep.subr.bf16.mxu0 0
  %193 = vmatpush1.bf16.msra.mxu0 %v150
  %194 = vmatprep.subr.bf16.mxu0 0
  %195 = vmatpush1.bf16.msra.mxu0 %v151
  %196 = vmatprep.subr.bf16.mxu0 0
  %197 = vmatpush1.bf16.msra.mxu0 %v152
  %198 = vmatprep.subr.bf16.mxu0 0
  %199 = vmatpush1.bf16.msra.mxu0 %v153
  %200 = vmatprep.subr.bf16.mxu0 0
  %201 = vmatpush1.bf16.msra.mxu0 %v154
  %202 = vmatprep.subr.bf16.mxu0 0
  %203 = vmatpush1.bf16.msra.mxu0 %v155
  %204 = vmatprep.mubr.bf16.mxu0 %v36
  %205 = vmatmul.mubr.bf16.gmra.mrb[0].mxu0 %v35
  %v206 = vpop.f32.mrb[0].mxu0
  %v207 = vadd.f32 %v74, %v206
  %v208 = vpop.f32.mrb[0].mxu0
  %v209 = vpop.f32.mrb[0].mxu0
  %v210 = vpop.f32.mrb[0].mxu0
  %211 = vdwg.mxu0
  %v212 = vmax.f32 %v207, 0.0
  %v213 = vpack.c.bf16 %v212, %v212
  %v214 = vld [vmem:[%s3] sm:$0xf]
  %v215 = vld [vmem:[%s3 + $0x4] sm:$0xf]
  %v216 = vld [vmem:[%s3 + $0x8] sm:$0xf]
  %v217 = vld [vmem:[%s3 + $0xc] sm:$0xf]
  %v218 = vld [vmem:[%s3 + $0x10] sm:$0xf]
  %v219 = vld [vmem:[%s3 + $0x14] sm:$0xf]
  %v220 = vld [vmem:[%s3 + $0x18] sm:$0xf]
  %v221 = vld [vmem:[%s3 + $0x1c] sm:$0xf]
  %v222 = vld [vmem:[%s3 + $0x20] sm:$0xf]
  %v223 = vld [vmem:[%s3 + $0x24] sm:$0xf]
  %v224 = vld [vmem:[%s3 + $0x28] sm:$0xf]
  %v225 = vld [vmem:[%s3 + $0x2c] sm:$0xf]
  %v226 = vld [vmem:[%s3 + $0x30] sm:$0xf]
  %v227 = vld [vmem:[%s3 + $0x34] sm:$0xf]
  %v228 = vld [vmem:[%s3 + $0x38] sm:$0xf]
  %v229 = vld [vmem:[%s3 + $0x3c] sm:$0xf]
  %v230 = vld [vmem:[%s4] sm:$0x1]
  %v232 = vlaneseq
  %v233 = vshrl.u32 %v232, 7
  %v234 = vsub.s32 0, %v233
  %v235 = vrot.slane %v230, %v234
  %v253 = vunpack.c.l.b16 %v214
  %v254 = vunpack.c.l.b16 %v215
  %v255 = vunpack.c.l.b16 %v216
  %v256 = vunpack.c.l.b16 %v217
  %v257 = vunpack.c.l.b16 %v218
  %v258 = vunpack.c.l.b16 %v219
  %v259 = vunpack.c.l.b16 %v220
  %v260 = vunpack.c.l.b16 %v221
  %v261 = vunpack.c.l.b16 %v222
  %v262 = vunpack.c.l.b16 %v223
  %v263 = vunpack.c.l.b16 %v224
  %v264 = vunpack.c.l.b16 %v225
  %v265 = vunpack.c.l.b16 %v226
  %v266 = vunpack.c.l.b16 %v227
  %v267 = vunpack.c.l.b16 %v228
  %v268 = vunpack.c.l.b16 %v229
  %v269 = vpack.c.b16 %v254, %v253
  %v270 = vpack.c.b16 %v256, %v255
  %v271 = vpack.c.b16 %v258, %v257
  %v272 = vpack.c.b16 %v260, %v259
  %v273 = vpack.c.b16 %v262, %v261
  %v274 = vpack.c.b16 %v264, %v263
  %v275 = vpack.c.b16 %v266, %v265
  %v276 = vpack.c.b16 %v268, %v267
  %285 = vmatprep.subr.bf16.mxu0 0
  %286 = vmatpush1.bf16.msra.mxu0 %v269
  %287 = vmatprep.subr.bf16.mxu0 0
  %288 = vmatpush1.bf16.msra.mxu0 %v270
  %289 = vmatprep.subr.bf16.mxu0 0
  %290 = vmatpush1.bf16.msra.mxu0 %v271
  %291 = vmatprep.subr.bf16.mxu0 0
  %292 = vmatpush1.bf16.msra.mxu0 %v272
  %293 = vmatprep.subr.bf16.mxu0 0
  %294 = vmatpush1.bf16.msra.mxu0 %v273
  %295 = vmatprep.subr.bf16.mxu0 0
  %296 = vmatpush1.bf16.msra.mxu0 %v274
  %297 = vmatprep.subr.bf16.mxu0 0
  %298 = vmatpush1.bf16.msra.mxu0 %v275
  %299 = vmatprep.subr.bf16.mxu0 0
  %300 = vmatpush1.bf16.msra.mxu0 %v276
  %301 = vmatprep.subr.bf16.mxu0 0
  %302 = vmatpush1.bf16.msra.mxu0 0
  %303 = vmatprep.subr.bf16.mxu0 0
  %304 = vmatpush1.bf16.msra.mxu0 0
  %305 = vmatprep.subr.bf16.mxu0 0
  %306 = vmatpush1.bf16.msra.mxu0 0
  %307 = vmatprep.subr.bf16.mxu0 0
  %308 = vmatpush1.bf16.msra.mxu0 0
  %309 = vmatprep.subr.bf16.mxu0 0
  %310 = vmatpush1.bf16.msra.mxu0 0
  %311 = vmatprep.subr.bf16.mxu0 0
  %312 = vmatpush1.bf16.msra.mxu0 0
  %313 = vmatprep.subr.bf16.mxu0 0
  %314 = vmatpush1.bf16.msra.mxu0 0
  %315 = vmatprep.subr.bf16.mxu0 0
  %316 = vmatpush1.bf16.msra.mxu0 0
  %317 = vmatprep.mubr.bf16.mxu0 0
  %318 = vmatmul.mubr.bf16.gmra.mrb[0].mxu0 %v213
  %v319 = vpop.f32.mrb[0].mxu0
  %v320 = vadd.f32 %v235, %v319
  %v321 = vpop.f32.mrb[0].mxu0
  %v322 = vpop.f32.mrb[0].mxu0
  %v323 = vpop.f32.mrb[0].mxu0
  %324 = vdwg.mxu0
  %v325 = vmax.f32 %v320, 0.0
  %v326 = vpack.c.bf16 %v325, %v325
  %v327 = vld [vmem:[%s5] sm:$0xf]
  %v328 = vld [vmem:[%s5 + $0x4] sm:$0xf]
  %v329 = vld [vmem:[%s5 + $0x8] sm:$0xf]
  %v330 = vld [vmem:[%s5 + $0xc] sm:$0xf]
  %v331 = vld [vmem:[%s5 + $0x10] sm:$0xf]
  %v332 = vld [vmem:[%s5 + $0x14] sm:$0xf]
  %v333 = vld [vmem:[%s5 + $0x18] sm:$0xf]
  %v334 = vld [vmem:[%s5 + $0x1c] sm:$0xf]
  %v335 = vld [vmem:[%s5 + $0x20] sm:$0xf]
  %v336 = vld [vmem:[%s5 + $0x24] sm:$0xf]
  %v337 = vld [vmem:[%s5 + $0x28] sm:$0xf]
  %v338 = vld [vmem:[%s5 + $0x2c] sm:$0xf]
  %v339 = vld [vmem:[%s5 + $0x30] sm:$0xf]
  %v340 = vld [vmem:[%s5 + $0x34] sm:$0xf]
  %v341 = vld [vmem:[%s5 + $0x38] sm:$0xf]
  %v342 = vld [vmem:[%s5 + $0x3c] sm:$0xf]
  %v343 = vld [vmem:[%s6] sm:$0x1]
  %v345 = vlaneseq
  %v346 = vshrl.u32 %v345, 7
  %v347 = vsub.s32 0, %v346
  %v348 = vrot.slane %v343, %v347
  %v366 = vunpack.c.l.b16 %v327
  %v367 = vunpack.c.l.b16 %v328
  %v368 = vunpack.c.l.b16 %v329
  %v369 = vunpack.c.l.b16 %v330
  %v370 = vunpack.c.l.b16 %v331
  %v371 = vunpack.c.l.b16 %v332
  %v372 = vunpack.c.l.b16 %v333
  %v373 = vunpack.c.l.b16 %v334
  %v374 = vunpack.c.l.b16 %v335
  %v375 = vunpack.c.l.b16 %v336
  %v376 = vunpack.c.l.b16 %v337
  %v377 = vunpack.c.l.b16 %v338
  %v378 = vunpack.c.l.b16 %v339
  %v379 = vunpack.c.l.b16 %v340
  %v380 = vunpack.c.l.b16 %v341
  %v381 = vunpack.c.l.b16 %v342
  %v382 = vpack.c.b16 %v367, %v366
  %v383 = vpack.c.b16 %v369, %v368
  %v384 = vpack.c.b16 %v371, %v370
  %v385 = vpack.c.b16 %v373, %v372
  %v386 = vpack.c.b16 %v375, %v374
  %v387 = vpack.c.b16 %v377, %v376
  %v388 = vpack.c.b16 %v379, %v378
  %v389 = vpack.c.b16 %v381, %v380
  %398 = vmatprep.subr.bf16.mxu0 0
  %399 = vmatpush1.bf16.msra.mxu0 %v382
  %400 = vmatprep.subr.bf16.mxu0 0
  %401 = vmatpush1.bf16.msra.mxu0 %v383
  %402 = vmatprep.subr.bf16.mxu0 0
  %403 = vmatpush1.bf16.msra.mxu0 %v384
  %404 = vmatprep.subr.bf16.mxu0 0
  %405 = vmatpush1.bf16.msra.mxu0 %v385
  %406 = vmatprep.subr.bf16.mxu0 0
  %407 = vmatpush1.bf16.msra.mxu0 %v386
  %408 = vmatprep.subr.bf16.mxu0 0
  %409 = vmatpush1.bf16.msra.mxu0 %v387
  %410 = vmatprep.subr.bf16.mxu0 0
  %411 = vmatpush1.bf16.msra.mxu0 %v388
  %412 = vmatprep.subr.bf16.mxu0 0
  %413 = vmatpush1.bf16.msra.mxu0 %v389
  %414 = vmatprep.subr.bf16.mxu0 0
  %415 = vmatpush1.bf16.msra.mxu0 0
  %416 = vmatprep.subr.bf16.mxu0 0
  %417 = vmatpush1.bf16.msra.mxu0 0
  %418 = vmatprep.subr.bf16.mxu0 0
  %419 = vmatpush1.bf16.msra.mxu0 0
  %420 = vmatprep.subr.bf16.mxu0 0
  %421 = vmatpush1.bf16.msra.mxu0 0
  %422 = vmatprep.subr.bf16.mxu0 0
  %423 = vmatpush1.bf16.msra.mxu0 0
  %424 = vmatprep.subr.bf16.mxu0 0
  %425 = vmatpush1.bf16.msra.mxu0 0
  %426 = vmatprep.subr.bf16.mxu0 0
  %427 = vmatpush1.bf16.msra.mxu0 0
  %428 = vmatprep.subr.bf16.mxu0 0
  %429 = vmatpush1.bf16.msra.mxu0 0
  %430 = vmatprep.mubr.bf16.mxu0 0
  %431 = vmatmul.mubr.bf16.gmra.mrb[0].mxu0 %v326
  %v432 = vpop.f32.mrb[0].mxu0
  %v433 = vadd.f32 %v348, %v432
  %v434 = vpop.f32.mrb[0].mxu0
  %v435 = vpop.f32.mrb[0].mxu0
  %v436 = vpop.f32.mrb[0].mxu0
  %437 = vdwg.mxu0
  %v438 = vmax.f32 %v433, 0.0
  %v439 = vpack.c.bf16 %v438, %v438
  %v440 = vld [vmem:[%s7] sm:$0xff]
  %v441 = vld [vmem:[%s7 + $0x8] sm:$0xff]
  %v442 = vld [vmem:[%s7 + $0x10] sm:$0xff]
  %v443 = vld [vmem:[%s7 + $0x18] sm:$0xff]
  %v444 = vld [vmem:[%s7 + $0x20] sm:$0xff]
  %v445 = vld [vmem:[%s7 + $0x28] sm:$0xff]
  %v446 = vld [vmem:[%s7 + $0x30] sm:$0xff]
  %v447 = vld [vmem:[%s7 + $0x38] sm:$0xff]
  %v448 = vld [vmem:[%s7 + $0x40] sm:$0xff]
  %v449 = vld [vmem:[%s7 + $0x48] sm:$0xff]
  %v450 = vld [vmem:[%s7 + $0x50] sm:$0xff]
  %v451 = vld [vmem:[%s7 + $0x58] sm:$0xff]
  %v452 = vld [vmem:[%s7 + $0x60] sm:$0xff]
  %v453 = vld [vmem:[%s7 + $0x68] sm:$0xff]
  %v454 = vld [vmem:[%s7 + $0x70] sm:$0xff]
  %v455 = vld [vmem:[%s7 + $0x78] sm:$0xff]
  %v456 = vld [vmem:[%s8] sm:$0x3]
  %v458 = vlaneseq
  %v459 = vshrl.u32 %v458, 7
  %v460 = vsub.s32 0, %v459
  %v461 = vrot.slane %v456, %v460
  %v462 = vlaneseq
  %v463 = vshrl.u32 %v462, 7
  %v464 = vsub.s32 1, %v463
  %v465 = vrot.slane %v456, %v464
  %v484 = vunpack.c.l.b16 %v440
  %v485 = vunpack.c.h.b16 %v440
  %v486 = vunpack.c.l.b16 %v441
  %v487 = vunpack.c.h.b16 %v441
  %v488 = vunpack.c.l.b16 %v442
  %v489 = vunpack.c.h.b16 %v442
  %v490 = vunpack.c.l.b16 %v443
  %v491 = vunpack.c.h.b16 %v443
  %v492 = vunpack.c.l.b16 %v444
  %v493 = vunpack.c.h.b16 %v444
  %v494 = vunpack.c.l.b16 %v445
  %v495 = vunpack.c.h.b16 %v445
  %v496 = vunpack.c.l.b16 %v446
  %v497 = vunpack.c.h.b16 %v446
  %v498 = vunpack.c.l.b16 %v447
  %v499 = vunpack.c.h.b16 %v447
  %v500 = vunpack.c.l.b16 %v448
  %v501 = vunpack.c.h.b16 %v448
  %v502 = vunpack.c.l.b16 %v449
  %v503 = vunpack.c.h.b16 %v449
  %v504 = vunpack.c.l.b16 %v450
  %v505 = vunpack.c.h.b16 %v450
  %v506 = vunpack.c.l.b16 %v451
  %v507 = vunpack.c.h.b16 %v451
  %v508 = vunpack.c.l.b16 %v452
  %v509 = vunpack.c.h.b16 %v452
  %v510 = vunpack.c.l.b16 %v453
  %v511 = vunpack.c.h.b16 %v453
  %v512 = vunpack.c.l.b16 %v454
  %v513 = vunpack.c.h.b16 %v454
  %v514 = vunpack.c.l.b16 %v455
  %v515 = vunpack.c.h.b16 %v455
  %v516 = vpack.c.b16 %v486, %v484
  %v517 = vpack.c.b16 %v487, %v485
  %v518 = vpack.c.b16 %v490, %v488
  %v519 = vpack.c.b16 %v491, %v489
  %v520 = vpack.c.b16 %v494, %v492
  %v521 = vpack.c.b16 %v495, %v493
  %v522 = vpack.c.b16 %v498, %v496
  %v523 = vpack.c.b16 %v499, %v497
  %v524 = vpack.c.b16 %v502, %v500
  %v525 = vpack.c.b16 %v503, %v501
  %v526 = vpack.c.b16 %v506, %v504
  %v527 = vpack.c.b16 %v507, %v505
  %v528 = vpack.c.b16 %v510, %v508
  %v529 = vpack.c.b16 %v511, %v509
  %v530 = vpack.c.b16 %v514, %v512
  %v531 = vpack.c.b16 %v515, %v513
  %548 = vmatprep.subr.bf16.mxu0 %v517
  %549 = vmatpush1.bf16.msra.mxu0 %v516
  %550 = vmatprep.subr.bf16.mxu0 %v519
  %551 = vmatpush1.bf16.msra.mxu0 %v518
  %552 = vmatprep.subr.bf16.mxu0 %v521
  %553 = vmatpush1.bf16.msra.mxu0 %v520
  %554 = vmatprep.subr.bf16.mxu0 %v523
  %555 = vmatpush1.bf16.msra.mxu0 %v522
  %556 = vmatprep.subr.bf16.mxu0 %v525
  %557 = vmatpush1.bf16.msra.mxu0 %v524
  %558 = vmatprep.subr.bf16.mxu0 %v527
  %559 = vmatpush1.bf16.msra.mxu0 %v526
  %560 = vmatprep.subr.bf16.mxu0 %v529
  %561 = vmatpush1.bf16.msra.mxu0 %v528
  %562 = vmatprep.subr.bf16.mxu0 %v531
  %563 = vmatpush1.bf16.msra.mxu0 %v530
  %564 = vmatprep.subr.bf16.mxu0 0
  %565 = vmatpush1.bf16.msra.mxu0 0
  %566 = vmatprep.subr.bf16.mxu0 0
  %567 = vmatpush1.bf16.msra.mxu0 0
  %568 = vmatprep.subr.bf16.mxu0 0
  %569 = vmatpush1.bf16.msra.mxu0 0
  %570 = vmatprep.subr.bf16.mxu0 0
  %571 = vmatpush1.bf16.msra.mxu0 0
  %572 = vmatprep.subr.bf16.mxu0 0
  %573 = vmatpush1.bf16.msra.mxu0 0
  %574 = vmatprep.subr.bf16.mxu0 0
  %575 = vmatpush1.bf16.msra.mxu0 0
  %576 = vmatprep.subr.bf16.mxu0 0
  %577 = vmatpush1.bf16.msra.mxu0 0
  %578 = vmatprep.subr.bf16.mxu0 0
  %579 = vmatpush1.bf16.msra.mxu0 0
  %580 = vmatprep.mubr.bf16.mxu0 0
  %581 = vmatmul.mubr.bf16.gmra.mrb[0].mxu0 %v439
  %v582 = vpop.f32.mrb[0].mxu0
  %v583 = vadd.f32 %v461, %v582
  %v584 = vpop.f32.mrb[0].mxu0
  %v585 = vadd.f32 %v465, %v584
  %v586 = vpop.f32.mrb[0].mxu0
  %v587 = vpop.f32.mrb[0].mxu0
  %588 = vdwg.mxu0
  %v589 = vtanh.pop %v583
  %v590 = vtanh.pop %v585
  %591 = vst [vmem:[%s9] sm:$0xff] %v589
  %592 = vst [vmem:[%s9 + $0x8] sm:$0xff] %v590
  // Predicated region
  $region38: #{net3_forward.1} parent=0 // pred_check
    _
  $region39: #{net3_forward.1} parent=0 // pred_check_branch
    %594 = sbr.rel (0) target = $region41
  $region40: #{net3_forward.1} parent=0 // pred_region
    _
  $region41: #{net3_forward.1} parent=0 // pred_fallthru
    _
  // Predicated region
  $region42: #{net3_forward.1} parent=0 // pred_check
    _
  $region43: #{net3_forward.1} parent=0 // pred_check_branch
    %596 = sbr.rel (0) target = $region45
  $region44: #{net3_forward.1} parent=0 // pred_region
    _
  $region45: #{net3_forward.1} parent=0 // pred_fallthru
    _

</llo_original>
